<compile_context>
chip_gen: v5e
topology: v5e:2x2
jax: 0.10.0
libtpu: 0.0.40
codegen_flags: <defaults>
</compile_context>

<pallas_src>
import functools

import jax
import jax.numpy as jnp
from jax.experimental import pallas as pl
from jax.experimental.pallas import tpu as pltpu


def _round_up(x, m):
    return ((x + m - 1) // m) * m


def _cdiv(a, b):
    return -(-a // b)


def _pad2d(a, rows, cols):
    pr, pc = rows - a.shape[0], cols - a.shape[1]
    if pr or pc:
        a = jnp.pad(a, ((0, pr), (0, pc)))
    return a


def _tpu_hw_info():
    """Returns (vmem_capacity_bytes, multi_tensorcore) with conservative fallbacks."""
    vmem_cap = None
    try:
        info = pltpu.get_tpu_info()
        cap = int(getattr(info, "vmem_capacity_bytes", 0) or 0)
        if cap > 0:
            vmem_cap = cap
    except Exception:
        vmem_cap = None
    kind = ""
    try:
        kind = jax.devices()[0].device_kind.lower()
    except Exception:
        pass
    multi_tc = ("v7" in kind) or ("7x" in kind)   # v7x: 2 TensorCores, 64 MiB VMEM/TC
    if vmem_cap is None:
        vmem_cap = (64 << 20) if multi_tc else (128 << 20)
    return vmem_cap, multi_tc


def _choose_tiles(M, d_model, d_ff, tm_max, tf_max, in_itemsize, out_itemsize,
                  need_acc, vmem_cap, multi_tc):
    """Pick (tm, tf) that fit VMEM, minimize padding waste, and keep grid_m >= 2 on v7x."""
    m8 = _round_up(max(M, 1), 8)
    dm_pad = _round_up(d_model, 128)        # lane-dense output writes
    dff_pad = _round_up(d_ff, 128)

    # d_ff slab width: largest multiple of 128 that divides dff_pad (zero extra
    # padding beyond lane alignment) and does not exceed tf_max.
    tf_cap = max(128, _round_up(min(max(tf_max, 128), dff_pad), 128))
    tf_cands = [c for c in range(tf_cap, 0, -128) if dff_pad % c == 0]
    if not tf_cands:
        tf_cands = [128]
    tf_i = 0

    # Row tile: as large as allowed (amortizes weight re-streaming, which costs
    # grid_m * (|W1|+|W2|) HBM bytes), with minimal M padding; >= 2 row tiles on
    # multi-TensorCore chips so the "parallel" axis shards across both TCs.
    tm0 = min(_round_up(max(tm_max, 8), 8), m8)
    ntiles = _cdiv(m8, tm0)
    if multi_tc and ntiles < 2 and m8 > 8:
        ntiles = 2
    tm = _round_up(_cdiv(m8, ntiles), 8)

    budget = int(0.75 * vmem_cap)

    def vmem_bytes(tm_, tf_):
        b = 2 * tm_ * dm_pad * in_itemsize        # x tile (double-buffered)
        b += 2 * dm_pad * tf_ * in_itemsize       # W1 slab
        b += 2 * tf_ * dm_pad * in_itemsize       # W2 slab
        b += 2 * dm_pad * 4                       # fused bias (f32)
        b += 2 * tm_ * dm_pad * out_itemsize      # output tile
        if need_acc:
            b += tm_ * dm_pad * 4                 # f32 accumulator scratch
        b += tm_ * tf_ * (4 + in_itemsize)        # h intermediate (f32) + its cast
        return b

    # Shrink tf first (does not change weight re-streaming), then tm.
    while vmem_bytes(tm, tf_cands[tf_i]) > budget:
        if tf_i + 1 < len(tf_cands):
            tf_i += 1
        elif tm > 8:
            tm = max(8, _round_up(tm // 2, 8))
        else:
            break
    tf = tf_cands[tf_i]

    grid_m = _cdiv(m8, tm)
    m_pad = grid_m * tm
    grid_f = dff_pad // tf
    return tm, tf, m_pad, dm_pad, dff_pad, grid_m, grid_f, vmem_bytes(tm, tf)


def _make_ffn_kernel(sub_steps, sub, acc_in_out):
    """out = x @ W1 @ W2 + bias, accumulated over the d_ff grid axis (axis 1).

    sub_steps/sub: process each (.., tf) weight slab in `sub_steps` statically
    unrolled chunks of width `sub`, giving the scheduler two independent
    matmul1 -> cast -> matmul2 chains to interleave.
    acc_in_out: when the output dtype is f32, accumulate directly into o_ref
    (the output block is resident across the reduction axis); otherwise use
    the trailing f32 VMEM scratch and cast on the last step.
    """
    def kernel(x_ref, w1_ref, w2_ref, bias_ref, o_ref, *scratch):
        acc_ref = o_ref if acc_in_out else scratch[0]
        f = pl.program_id(1)

        @pl.when(f == 0)
        def _init():
            # Fold the fused bias (b1 @ W2 + b2) into the accumulator once.
            acc_ref[...] = jnp.broadcast_to(
                bias_ref[...].astype(jnp.float32), acc_ref.shape)

        x = x_ref[...]
        for j in range(sub_steps):
            lo = j * sub
            h = jnp.dot(x, w1_ref[:, lo:lo + sub],
                        preferred_element_type=jnp.float32)
            # Dropout(p=0.0) is the identity -> omitted.
            acc_ref[...] += jnp.dot(h.astype(w2_ref.dtype),
                                    w2_ref[lo:lo + sub, :],
                                    preferred_element_type=jnp.float32)

        if not acc_in_out:
            @pl.when(f == pl.num_programs(1) - 1)
            def _finalize():
                o_ref[...] = acc_ref[...].astype(o_ref.dtype)

    return kernel


@functools.partial(jax.jit,
                   static_argnames=("tm", "tf", "compute_dtype", "force_pallas"))
def feed_forward(x, w1, b1, w2, b2, *, tm=512, tf=1024, compute_dtype=None,
                 force_pallas=False):
    """FeedForward forward pass: (x @ W1 + b1) @ W2 + b2  (dropout p=0 -> identity).

    x : (..., d_model)
    w1: (d_model, d_ff)   b1: (d_ff,)      # transposed vs. nn.Linear (out,in) storage
    w2: (d_ff, d_model)   b2: (d_model,)
    compute_dtype: e.g. jnp.bfloat16 on v6e/v7x for ~2x MXU rate and half the
    weight HBM traffic (f32 accumulation kept; expect bf16-level tolerances).
    """
    orig_shape = x.shape
    d_model = orig_shape[-1]
    d_ff = w1.shape[1]
    out_dtype = x.dtype

    x2 = x.reshape(-1, d_model)
    M = x2.shape[0]

    # Fold b1 into the output bias (in f32, before any down-cast):
    #   (x W1 + b1) W2 + b2 = x W1 W2 + (b1 W2 + b2)
    b_fused = (jnp.dot(b1.astype(jnp.float32), w2.astype(jnp.float32))
               + b2.astype(jnp.float32)).reshape(1, d_model)

    if compute_dtype is not None:
        x2, w1, w2 = (t.astype(compute_dtype) for t in (x2, w1, w2))

    in_itemsize = max(jnp.dtype(x2.dtype).itemsize, jnp.dtype(w1.dtype).itemsize)
    out_itemsize = jnp.dtype(out_dtype).itemsize
    acc_in_out = (out_dtype == jnp.float32)

    vmem_cap, multi_tc = _tpu_hw_info()
    (tm_r, tf_r, m_pad, dm_pad, dff_pad, grid_m, grid_f, vmem_used) = _choose_tiles(
        M, d_model, d_ff, tm, tf, in_itemsize, out_itemsize,
        need_acc=not acc_in_out, vmem_cap=vmem_cap, multi_tc=multi_tc)

    # Tiny problems: a single-tile pallas_call is pure overhead vs. XLA fusion.
    if grid_m * grid_f == 1 and not force_pallas:
        h = jnp.dot(x2, w1, preferred_element_type=jnp.float32) + b1.astype(jnp.float32)
        out = (jnp.dot(h.astype(w2.dtype), w2, preferred_element_type=jnp.float32)
               + b2.astype(jnp.float32))
        return out.astype(out_dtype).reshape(orig_shape)

    # Zero-pad so every grid tile is full (padding contributes exactly 0).
    x_p = _pad2d(x2, m_pad, dm_pad)
    w1_p = _pad2d(w1, dm_pad, dff_pad)
    w2_p = _pad2d(w2, dff_pad, dm_pad)
    bias_p = _pad2d(b_fused, 1, dm_pad)

    sub_steps = 2 if (tf_r % 256 == 0 and tf_r >= 256) else 1
    sub = tf_r // sub_steps

    kernel = _make_ffn_kernel(sub_steps, sub, acc_in_out)
    scratch_shapes = [] if acc_in_out else [pltpu.VMEM((tm_r, dm_pad), jnp.float32)]

    # Scoped VMEM limit: generous headroom over our estimate, clamped below the
    # physical per-TC capacity (64 MiB on v7x, 128 MiB on v5e/v6e).
    vmem_limit = int(min(max(int(vmem_used * 1.5), 32 << 20), int(0.9 * vmem_cap)))

    cost = pl.CostEstimate(
        flops=4 * m_pad * dm_pad * dff_pad,                   # two matmuls
        transcendentals=0,
        bytes_accessed=int(in_itemsize * (x_p.size + grid_m * (w1_p.size + w2_p.size))
                           + out_itemsize * m_pad * dm_pad
                           + 4 * dm_pad),
    )

    out = pl.pallas_call(
        kernel,
        out_shape=jax.ShapeDtypeStruct((m_pad, dm_pad), out_dtype),
        grid_spec=pltpu.PrefetchScalarGridSpec(
            num_scalar_prefetch=0,
            grid=(grid_m, grid_f),
            in_specs=[
                pl.BlockSpec((tm_r, dm_pad), lambda i, f: (i, 0)),   # x row tile
                pl.BlockSpec((dm_pad, tf_r), lambda i, f: (0, f)),   # W1 d_ff slab
                pl.BlockSpec((tf_r, dm_pad), lambda i, f: (f, 0)),   # W2 d_ff slab
                pl.BlockSpec((1, dm_pad), lambda i, f: (0, 0)),      # fused bias
            ],
            out_specs=pl.BlockSpec((tm_r, dm_pad), lambda i, f: (i, 0)),
            scratch_shapes=scratch_shapes,
        ),
        compiler_params=pltpu.CompilerParams(
            dimension_semantics=("parallel", "arbitrary"),
            vmem_limit_bytes=vmem_limit,
        ),
        cost_estimate=cost,
    )(x_p, w1_p, w2_p, bias_p)

    if m_pad != M or dm_pad != d_model:
        out = out[:M, :d_model]
    return out.reshape(orig_shape)


if __name__ == "__main__":
    # Small shapes consistent with the module: batch=2, seq=8, d_model=128, d_ff=512.
    batch, seq, d_model, d_ff = 2, 8, 128, 512

    key = jax.random.PRNGKey(0)
    kx, kw1, kb1, kw2, kb2 = jax.random.split(key, 5)

    x = jax.random.normal(kx, (batch, seq, d_model), dtype=jnp.float32)
    # PyTorch nn.Linear stores weight as (out, in); the kernel uses (in, out).
    w1 = jax.random.normal(kw1, (d_model, d_ff), dtype=jnp.float32) * 0.05
    b1 = jax.random.normal(kb1, (d_ff,), dtype=jnp.float32) * 0.05
    w2 = jax.random.normal(kw2, (d_ff, d_model), dtype=jnp.float32) * 0.05
    b2 = jax.random.normal(kb2, (d_model,), dtype=jnp.float32) * 0.05

    # Pure-JAX reference — Dropout(p=0.0) is the identity.
    ref = (x @ w1 + b1) @ w2 + b2

    # 1) Pallas path with small explicit tiles -> grid (2, 2): exercises the resident
    #    accumulator across the d_ff axis and the 2-way sub-chunk interleave.
    out = feed_forward(x, w1, b1, w2, b2, tm=8, tf=256, force_pallas=True)
    jax.block_until_ready(out)
    assert out.shape == ref.shape
    assert jnp.allclose(out, ref, atol=2e-3, rtol=2e-3), "pallas f32 mismatch vs reference"

    # 2) Default call: at these tiny shapes this may take the jnp fallback (or the
    #    pallas path on multi-TC chips) — semantics must match either way.
    out2 = feed_forward(x, w1, b1, w2, b2)
    jax.block_until_ready(out2)
    assert jnp.allclose(out2, ref, atol=2e-3, rtol=2e-3), "default path mismatch vs reference"

    # 3) bf16 compute / bf16 output: exercises the f32-scratch kernel variant.
    out3 = feed_forward(x.astype(jnp.bfloat16), w1, b1, w2, b2,
                        tm=8, tf=256, compute_dtype=jnp.bfloat16, force_pallas=True)
    jax.block_until_ready(out3)
    assert jnp.allclose(out3.astype(jnp.float32), ref, atol=6e-2, rtol=6e-2), \
        "pallas bf16 mismatch vs reference"

    print("KERNEL_OK")
</pallas_src>

<mosaic_0001>
module attributes {stable_mosaic.version = 11 : i64} {
  func.func @kernel(%arg0: i32, %arg1: i32, %arg2: memref<8x128xf32, #tpu.memory_space<vmem>>, %arg3: memref<128x256xf32, #tpu.memory_space<vmem>>, %arg4: memref<256x128xf32, #tpu.memory_space<vmem>>, %arg5: memref<1x128xf32, #tpu.memory_space<vmem>>, %arg6: memref<8x128xf32, #tpu.memory_space<vmem>>) attributes {dimension_semantics = [#tpu.dimension_semantics<parallel>, #tpu.dimension_semantics<arbitrary>], iteration_bounds = array<i64: 2, 2>, scalar_prefetch = 0 : i64, scratch_operands = 0 : i64, tpu.core_type = #tpu.core_type<tc>, window_params = [{transform_indices = @transform_0, window_bounds = array<i64: 8, 128>}, {transform_indices = @transform_1, window_bounds = array<i64: 128, 256>}, {transform_indices = @transform_2, window_bounds = array<i64: 256, 128>}, {pipeline_mode = #tpu.pipeline_mode<synchronous>, transform_indices = @transform_3, window_bounds = array<i64: 1, 128>}, {transform_indices = @transform_4, window_bounds = array<i64: 8, 128>}]} {
    %c0_i32 = arith.constant 0 : i32
    %0 = arith.cmpi eq, %arg1, %c0_i32 : i32
    %1 = arith.extui %0 : i1 to i32
    %c0_i32_0 = arith.constant 0 : i32
    %2 = arith.cmpi ne, %1, %c0_i32_0 : i32
    scf.if %2 {
      %c0_20 = arith.constant 0 : index
      %c0_21 = arith.constant 0 : index
      %18 = vector.load %arg5[%c0_20, %c0_21] : memref<1x128xf32, #tpu.memory_space<vmem>>, vector<1x128xf32>
      %19 = vector.shape_cast %18 : vector<1x128xf32> to vector<1x128xf32>
      %20 = vector.broadcast %19 : vector<1x128xf32> to vector<8x128xf32>
      %c0_22 = arith.constant 0 : index
      %c0_23 = arith.constant 0 : index
      %21 = vector.load %arg6[%c0_22, %c0_23] : memref<8x128xf32, #tpu.memory_space<vmem>>, vector<8x128xf32>
      tpu.vector_store %arg6[%c0_22, %c0_23], %20 {strides = array<i32>} : memref<8x128xf32, #tpu.memory_space<vmem>>, vector<8x128xf32>,
    } else {
    }
    %c0 = arith.constant 0 : index
    %c0_1 = arith.constant 0 : index
    %3 = vector.load %arg2[%c0, %c0_1] : memref<8x128xf32, #tpu.memory_space<vmem>>, vector<8x128xf32>
    %c0_2 = arith.constant 0 : index
    %c0_3 = arith.constant 0 : index
    %4 = vector.load %arg3[%c0_2, %c0_3] : memref<128x256xf32, #tpu.memory_space<vmem>>, vector<128x128xf32>
    %cst = arith.constant dense<0.000000e+00> : vector<8x128xf32>
    %5 = tpu.matmul %3, %4, %cst {dimension_numbers = #tpu.dot_dimension_numbers<[1], [0], [0], [1], [0, 0, 1, 1], [], []>} : vector<8x128xf32>, vector<128x128xf32>, vector<8x128xf32> -> vector<8x128xf32>
    %c0_4 = arith.constant 0 : index
    %c0_5 = arith.constant 0 : index
    %6 = vector.load %arg6[%c0_4, %c0_5] : memref<8x128xf32, #tpu.memory_space<vmem>>, vector<8x128xf32>
    %c0_6 = arith.constant 0 : index
    %c0_7 = arith.constant 0 : index
    %7 = vector.load %arg4[%c0_6, %c0_7] : memref<256x128xf32, #tpu.memory_space<vmem>>, vector<128x128xf32>
    %cst_8 = arith.constant dense<0.000000e+00> : vector<8x128xf32>
    %8 = tpu.matmul %5, %7, %cst_8 {dimension_numbers = #tpu.dot_dimension_numbers<[1], [0], [0], [1], [0, 0, 1, 1], [], []>} : vector<8x128xf32>, vector<128x128xf32>, vector<8x128xf32> -> vector<8x128xf32>
    %9 = arith.addf %6, %8 : vector<8x128xf32>
    %c0_9 = arith.constant 0 : index
    %c0_10 = arith.constant 0 : index
    %10 = vector.load %arg6[%c0_9, %c0_10] : memref<8x128xf32, #tpu.memory_space<vmem>>, vector<8x128xf32>
    tpu.vector_store %arg6[%c0_9, %c0_10], %9 {strides = array<i32>} : memref<8x128xf32, #tpu.memory_space<vmem>>, vector<8x128xf32>,
    %c0_11 = arith.constant 0 : index
    %c128 = arith.constant 128 : index
    %11 = vector.load %arg3[%c0_11, %c128] : memref<128x256xf32, #tpu.memory_space<vmem>>, vector<128x128xf32>
    %cst_12 = arith.constant dense<0.000000e+00> : vector<8x128xf32>
    %12 = tpu.matmul %3, %11, %cst_12 {dimension_numbers = #tpu.dot_dimension_numbers<[1], [0], [0], [1], [0, 0, 1, 1], [], []>} : vector<8x128xf32>, vector<128x128xf32>, vector<8x128xf32> -> vector<8x128xf32>
    %c0_13 = arith.constant 0 : index
    %c0_14 = arith.constant 0 : index
    %13 = vector.load %arg6[%c0_13, %c0_14] : memref<8x128xf32, #tpu.memory_space<vmem>>, vector<8x128xf32>
    %c128_15 = arith.constant 128 : index
    %c0_16 = arith.constant 0 : index
    %14 = vector.load %arg4[%c128_15, %c0_16] : memref<256x128xf32, #tpu.memory_space<vmem>>, vector<128x128xf32>
    %cst_17 = arith.constant dense<0.000000e+00> : vector<8x128xf32>
    %15 = tpu.matmul %12, %14, %cst_17 {dimension_numbers = #tpu.dot_dimension_numbers<[1], [0], [0], [1], [0, 0, 1, 1], [], []>} : vector<8x128xf32>, vector<128x128xf32>, vector<8x128xf32> -> vector<8x128xf32>
    %16 = arith.addf %13, %15 : vector<8x128xf32>
    %c0_18 = arith.constant 0 : index
    %c0_19 = arith.constant 0 : index
    %17 = vector.load %arg6[%c0_18, %c0_19] : memref<8x128xf32, #tpu.memory_space<vmem>>, vector<8x128xf32>
    tpu.vector_store %arg6[%c0_18, %c0_19], %16 {strides = array<i32>} : memref<8x128xf32, #tpu.memory_space<vmem>>, vector<8x128xf32>,
    return
  }
  func.func @transform_0(%arg0: i32, %arg1: i32) -> (i32, i32) {
    %c0_i32 = arith.constant 0 : i32
    %c0_i32_0 = arith.constant 0 : i32
    return %arg0, %c0_i32 : i32, i32
  }
  func.func @transform_1(%arg0: i32, %arg1: i32) -> (i32, i32) {
    %c0_i32 = arith.constant 0 : i32
    %c0_i32_0 = arith.constant 0 : i32
    return %c0_i32, %arg1 : i32, i32
  }
  func.func @transform_2(%arg0: i32, %arg1: i32) -> (i32, i32) {
    %c0_i32 = arith.constant 0 : i32
    %c0_i32_0 = arith.constant 0 : i32
    return %arg1, %c0_i32 : i32, i32
  }
  func.func @transform_3(%arg0: i32, %arg1: i32) -> (i32, i32) {
    %c0_i32 = arith.constant 0 : i32
    %c0_i32_0 = arith.constant 0 : i32
    %c0_i32_1 = arith.constant 0 : i32
    return %c0_i32, %c0_i32_0 : i32, i32
  }
  func.func @transform_4(%arg0: i32, %arg1: i32) -> (i32, i32) {
    %c0_i32 = arith.constant 0 : i32
    %c0_i32_0 = arith.constant 0 : i32
    return %arg0, %c0_i32 : i32, i32
  }
}

</mosaic_0001>

<llo_original>
// kernel: feed_forward.1
$region0: #{feed_forward.1}
  #allocation0 [shape = 'u32[]', space=smem, size = 0x4, offset = 0x4, fixed_abs, tag = 'smem constant byte address 0x4 - core index']
  #allocation1 [shape = 'u32[72,128]{1,0:T(1,128)}', space=vmem, size = 0x9000, scoped, tag = 'internal scratch']
  %s0 = inlined_call_operand.hbm [shape: f32[16,128], index: 0, kind: input, shape index: {}]
  %s1 = inlined_call_operand.hbm [shape: f32[128,512], index: 1, kind: input, shape index: {}]
  %s2 = inlined_call_operand.vmem [shape: f32[512,128], index: 2, kind: input, shape index: {}]
  %s3 = inlined_call_operand.vmem [shape: f32[1,128], index: 3, kind: input, shape index: {}]
  %s4 = inlined_call_operand.hbm [shape: f32[16,128], index: 4, kind: output, shape index: {}]
  %s5 = sld [smem:[#allocation0]]
  $region61: #{feed_forward.1} parent=0
    _
  %s7 = ssub.s32 1, %s5
  %s8 = scalar_select 0, %s7, %s5
  $region1: #{feed_forward.1} parent=0
    #allocation2 [shape = 'u8[8192]{0}', space=vmem, size = 0x2000, scoped, tag = 'input window, operand 0']
    #allocation3 [shape = 's32[2]{0}', space=sflag, size = 0x8, scoped, tag = 'scoped memory for feed_forward.1']
    #allocation4 [shape = 's32[2]{0}', space=sflag, size = 0x8, scoped, tag = 'scoped memory for feed_forward.1']
    #allocation5 [shape = 'u8[262144]{0}', space=vmem, size = 0x40000, scoped, tag = 'input window, operand 1']
    #allocation6 [shape = 's32[2]{0}', space=sflag, size = 0x8, scoped, tag = 'scoped memory for feed_forward.1']
    #allocation7 [shape = 'u8[8192]{0}', space=vmem, size = 0x2000, scoped, tag = 'output window, operand 0']
    %9 = vsyncpa [#allocation3], 0
    %s10 = scalar_lea.sflag [#allocation3], 1
    %11 = vsyncpa %s10, 0
    %12 = vsyncpa [#allocation6], 0
    %s13 = scalar_lea.sflag [#allocation6], 1
    %14 = vsyncpa %s13, 0
    %15 = vsyncpa [#allocation4], 0
    %s16 = scalar_lea.sflag [#allocation4], 1
    %17 = vsyncpa %s16, 0
    loop: start=0, step=1, limit=6
    $region2: #{feed_forward.1} parent=1 // loop_pre_header
      _
    $region3: #{feed_forward.1} parent=1 // loop_header
      %s19 = sphi 0, %s23
      %p20 = scmp.ge.s32.totalorder %s19, 6
      %s26 = sphi 0, %s38
      %s27 = sphi 0, %s34
      %s28 = sphi 0, %s26
      %s29 = sphi 0, %s27
      %s30 = sphi 0, %s28
      %s31 = sphi 0, %s29
      %s41 = sphi 0, %s43
      %s44 = sphi 0, %s41
      %s45 = sphi 0, %s44
      %s61 = sphi 0, %s45
      %s67 = sphi 0, %s69
      %s70 = sphi 0, %s67
      %s71 = sphi 0, %s70
      %s87 = sphi 0, %s71
      %s93 = sphi 0, %s95
      %s96 = sphi 0, %s93
      %s97 = sphi 0, %s96
      %s113 = sphi 0, %s97
      %s117 = sphi 0, %s117
      %s119 = sphi 0, %s117
      %s120 = sphi 0, %s119
      %s134 = sphi 0, %s120
      %s140 = sphi 0, %s142
      %s143 = sphi 0, %s140
      %s144 = sphi 0, %s143
      %s160 = sphi 0, %s144
    $region4: #{feed_forward.1} parent=1 // loop_header_branch
      %22 = sbr.rel (%p20) target = $region8
    $region5: #{feed_forward.1} parent=1 // loop_body
      %s24 = ssub.s32 %s19, 1
      %s25 = ssub.s32 %s19, 2
      %s32 = sadd.s32 1, %s27
      %p33 = scmp.ge.s32.totalorder %s32, 2
      %s34 = scalar_select %p33, 0, %s32
      %s35 = sadd.s32 1, %s26
      %s36 = scalar_select %p33, %s35, %s26
      %p37 = scmp.ge.s32.totalorder %s36, 2
      %s38 = scalar_select %p37, 0, %s36
      %s39 = ssub.s32 %s26, %s38
      %p40 = scmp.eq.s32.totalorder %s39, 0
      %s42 = sadd.s32 %s41, 1
      %s43 = scalar_select %p40, %s41, %s42
      %p46 = pneg %p40
      %p47 = scmp.eq.s32.totalorder %s19, 3
      %p48 = por %p46, %p47
      %p49 = scmp.ne.s32.totalorder %s41, %s44
      %p50 = scmp.eq.s32.totalorder %s19, 0
      %p51 = por %p49, %p50
      %p52 = scmp.ne.s32.totalorder %s41, %s44
      %p53 = scmp.eq.s32.totalorder %s24, 3
      %p54 = por %p52, %p53
      %p55 = scmp.ne.s32.totalorder %s44, %s45
      %p56 = scmp.eq.s32.totalorder %s24, 0
      %p57 = por %p55, %p56
      %p58 = scmp.ne.s32.totalorder %s44, %s45
      %p59 = scmp.eq.s32.totalorder %s25, 3
      %p60 = por %p58, %p59
      %p62 = scmp.ne.s32.totalorder %s45, %s61
      %p63 = scmp.eq.s32.totalorder %s25, 0
      %p64 = por %p62, %p63
      %s65 = ssub.s32 %s27, %s34
      %p66 = scmp.eq.s32.totalorder %s65, 0
      %s68 = sadd.s32 %s67, 1
      %s69 = scalar_select %p66, %s67, %s68
      %p72 = pneg %p66
      %p73 = scmp.eq.s32.totalorder %s19, 3
      %p74 = por %p72, %p73
      %p75 = scmp.ne.s32.totalorder %s67, %s70
      %p76 = scmp.eq.s32.totalorder %s19, 0
      %p77 = por %p75, %p76
      %p78 = scmp.ne.s32.totalorder %s67, %s70
      %p79 = scmp.eq.s32.totalorder %s24, 3
      %p80 = por %p78, %p79
      %p81 = scmp.ne.s32.totalorder %s70, %s71
      %p82 = scmp.eq.s32.totalorder %s24, 0
      %p83 = por %p81, %p82
      %p84 = scmp.ne.s32.totalorder %s70, %s71
      %p85 = scmp.eq.s32.totalorder %s25, 3
      %p86 = por %p84, %p85
      %p88 = scmp.ne.s32.totalorder %s71, %s87
      %p89 = scmp.eq.s32.totalorder %s25, 0
      %p90 = por %p88, %p89
      %s91 = ssub.s32 %s27, %s34
      %p92 = scmp.eq.s32.totalorder %s91, 0
      %s94 = sadd.s32 %s93, 1
      %s95 = scalar_select %p92, %s93, %s94
      %p98 = pneg %p92
      %p99 = scmp.eq.s32.totalorder %s19, 3
      %p100 = por %p98, %p99
      %p101 = scmp.ne.s32.totalorder %s93, %s96
      %p102 = scmp.eq.s32.totalorder %s19, 0
      %p103 = por %p101, %p102
      %p104 = scmp.ne.s32.totalorder %s93, %s96
      %p105 = scmp.eq.s32.totalorder %s24, 3
      %p106 = por %p104, %p105
      %p107 = scmp.ne.s32.totalorder %s96, %s97
      %p108 = scmp.eq.s32.totalorder %s24, 0
      %p109 = por %p107, %p108
      %p110 = scmp.ne.s32.totalorder %s96, %s97
      %p111 = scmp.eq.s32.totalorder %s25, 3
      %p112 = por %p110, %p111
      %p114 = scmp.ne.s32.totalorder %s97, %s113
      %p115 = scmp.eq.s32.totalorder %s25, 0
      %p116 = por %p114, %p115
      %s118 = sadd.s32 %s117, 1
      %p121 = scmp.eq.s32.totalorder %s19, 3
      %p122 = scmp.ne.s32.totalorder %s117, %s119
      %p123 = scmp.eq.s32.totalorder %s19, 0
      %p124 = por %p122, %p123
      %p125 = scmp.ne.s32.totalorder %s117, %s119
      %p126 = scmp.eq.s32.totalorder %s24, 3
      %p127 = por %p125, %p126
      %p128 = scmp.ne.s32.totalorder %s119, %s120
      %p129 = scmp.eq.s32.totalorder %s24, 0
      %p130 = por %p128, %p129
      %p131 = scmp.ne.s32.totalorder %s119, %s120
      %p132 = scmp.eq.s32.totalorder %s25, 3
      %p133 = por %p131, %p132
      %p135 = scmp.ne.s32.totalorder %s120, %s134
      %p136 = scmp.eq.s32.totalorder %s25, 0
      %p137 = por %p135, %p136
      %s138 = ssub.s32 %s26, %s38
      %p139 = scmp.eq.s32.totalorder %s138, 0
      %s141 = sadd.s32 %s140, 1
      %s142 = scalar_select %p139, %s140, %s141
      %p145 = pneg %p139
      %p146 = scmp.eq.s32.totalorder %s19, 3
      %p147 = por %p145, %p146
      %p148 = scmp.ne.s32.totalorder %s140, %s143
      %p149 = scmp.eq.s32.totalorder %s19, 0
      %p150 = por %p148, %p149
      %p151 = scmp.ne.s32.totalorder %s140, %s143
      %p152 = scmp.eq.s32.totalorder %s24, 3
      %p153 = por %p151, %p152
      %p154 = scmp.ne.s32.totalorder %s143, %s144
      %p155 = scmp.eq.s32.totalorder %s24, 0
      %p156 = por %p154, %p155
      %p157 = scmp.ne.s32.totalorder %s143, %s144
      %p158 = scmp.eq.s32.totalorder %s25, 3
      %p159 = por %p157, %p158
      %p161 = scmp.ne.s32.totalorder %s144, %s160
      %p162 = scmp.eq.s32.totalorder %s25, 0
      %p163 = por %p161, %p162
      %p164 = scmp.le.s32.totalorder 1, %s19
      %p165 = scmp.lt.s32.totalorder %s19, 5
      %p166 = pnand %p164, %p165
      %p167 = pneg %p166
      // Predicated region
      $region9: #{feed_forward.1} parent=5 // pred_check
        _
      $region10: #{feed_forward.1} parent=5 // pred_check_branch
        %169 = sbr.rel (%p166) target = $region12
      $region11: #{feed_forward.1} parent=5 // pred_region
        %s170 = ssub.s32 %s19, 1
        // Predicated region
        $region13: #{feed_forward.1} parent=11 // pred_check
          %p171 = pneg %p130
        $region14: #{feed_forward.1} parent=11 // pred_check_branch
          %173 = sbr.rel (%p171) target = $region16
        $region15: #{feed_forward.1} parent=11 // pred_region
          _
        $region16: #{feed_forward.1} parent=11 // pred_fallthru
          _
      $region12: #{feed_forward.1} parent=5 // pred_fallthru
        _
      %p174 = scmp.lt.s32.totalorder %s19, 4
      // Predicated region
      $region17: #{feed_forward.1} parent=5 // pred_check
        %p175 = pneg %p174
      $region18: #{feed_forward.1} parent=5 // pred_check_branch
        %177 = sbr.rel (%p175) target = $region20
      $region19: #{feed_forward.1} parent=5 // pred_region
        // Predicated region
        $region21: #{feed_forward.1} parent=19 // pred_check
          %p178 = pneg %p51
        $region22: #{feed_forward.1} parent=19 // pred_check_branch
          %180 = sbr.rel (%p178) target = $region24
        $region23: #{feed_forward.1} parent=19 // pred_region
          %s181 = sand.u32 %s41, 1
          %s182 = scalar_lea.sflag [#allocation3], %s181
          %s183 = sand.u32 %s41, 1
          %s184 = smul.addr %s183, 8
          %s185 = scalar_lea.vmem [#allocation2], %s184
          %187 = vsyncadd %s182, 0
          %s188 = smul.addr %s26, 8
          %s189 = scalar_lea.hbm %s0, %s188
          %s191 = sshll.u32 %s189, 4
          %s192 = int_to_ptr.hbm [resolvable:$true] %s191
          %s193 = sshll.u32 %s185, 4
          %s194 = int_to_ptr.vmem [resolvable:$true] %s193
          %196 = dma.hbm_to_vmem [thread:$0]  %s192, 128, %s194, %s182
        $region24: #{feed_forward.1} parent=19 // pred_fallthru
          _
        // Predicated region
        $region25: #{feed_forward.1} parent=19 // pred_check
          %p197 = pneg %p77
        $region26: #{feed_forward.1} parent=19 // pred_check_branch
          %199 = sbr.rel (%p197) target = $region28
        $region27: #{feed_forward.1} parent=19 // pred_region
          %s200 = sand.u32 %s67, 1
          %s201 = scalar_lea.sflag [#allocation6], %s200
          %s202 = sand.u32 %s67, 1
          %s203 = smul.addr %s202, 256
          %s204 = scalar_lea.vmem [#allocation5], %s203
          %s205 = smul.u32 2, %s27
          %207 = vsyncadd %s201, 0
          %s208 = smul.addr %s205, 8
          %s209 = scalar_lea.hbm %s1, %s208
          %s210 = sshll.u32 %s209, 4
          %s211 = int_to_ptr.hbm [resolvable:$true] %s210
          %s212 = sshll.u32 %s204, 4
          %s213 = int_to_ptr.vmem [resolvable:$true] %s212
          %218 = dma.hbm_to_vmem [thread:$0]  %s211, 4096, %s213, %s201, 512, 256, 16
        $region28: #{feed_forward.1} parent=19 // pred_fallthru
          _
        // Predicated region
        $region29: #{feed_forward.1} parent=19 // pred_check
          %p219 = pneg %p103
        $region30: #{feed_forward.1} parent=19 // pred_check_branch
          %221 = sbr.rel (%p219) target = $region32
        $region31: #{feed_forward.1} parent=19 // pred_region
          %s222 = smul.u32 32, %s27
          %p223 = scmp.lt.s32.totalorder %s222, 63
          %s224 = scalar_select %p223, %s222, 63
          %s225 = smul.addr %s224, 8
          %s226 = scalar_lea.vmem %s2, %s225
          %s227 = smul.u32 32, %s27
        $region32: #{feed_forward.1} parent=19 // pred_fallthru
          _
      $region20: #{feed_forward.1} parent=5 // pred_fallthru
        _
      %p228 = scmp.le.s32.totalorder 1, %s19
      %p229 = scmp.lt.s32.totalorder %s19, 5
      %p230 = pnand %p228, %p229
      %p231 = pneg %p230
      // Predicated region
      $region33: #{feed_forward.1} parent=5 // pred_check
        _
      $region34: #{feed_forward.1} parent=5 // pred_check_branch
        %233 = sbr.rel (%p230) target = $region36
      $region35: #{feed_forward.1} parent=5 // pred_region
        %s234 = ssub.s32 %s19, 1
        %s235 = sand.u32 %s44, 1
        %s236 = scalar_lea.sflag [#allocation3], %s235
        %s237 = sand.u32 %s44, 1
        %s238 = smul.addr %s237, 8
        %s239 = scalar_lea.vmem [#allocation2], %s238
        // Predicated region
        $region37: #{feed_forward.1} parent=35 // pred_check
          %p240 = pneg %p57
        $region38: #{feed_forward.1} parent=35 // pred_check_branch
          %242 = sbr.rel (%p240) target = $region40
        $region39: #{feed_forward.1} parent=35 // pred_region
          %244 = dma.done %s236, 128
        $region40: #{feed_forward.1} parent=35 // pred_fallthru
          _
        %s245 = sand.u32 %s70, 1
        %s246 = scalar_lea.sflag [#allocation6], %s245
        %s247 = sand.u32 %s70, 1
        %s248 = smul.addr %s247, 256
        %s249 = scalar_lea.vmem [#allocation5], %s248
        // Predicated region
        $region41: #{feed_forward.1} parent=35 // pred_check
          %p250 = pneg %p83
        $region42: #{feed_forward.1} parent=35 // pred_check_branch
          %252 = sbr.rel (%p250) target = $region44
        $region43: #{feed_forward.1} parent=35 // pred_region
          %254 = dma.done %s246, 4096
        $region44: #{feed_forward.1} parent=35 // pred_fallthru
          _
        %s255 = sand.u32 %s44, 1
        %s256 = scalar_lea.sflag [#allocation3], %s255
        %s257 = sand.u32 %s44, 1
        %s258 = smul.addr %s257, 8
        %s259 = scalar_lea.vmem [#allocation2], %s258
        %p260 = pneg %p57
        %p261 = pneg %p54
        %s262 = sand.u32 %s70, 1
        %s263 = scalar_lea.sflag [#allocation6], %s262
        %s264 = sand.u32 %s70, 1
        %s265 = smul.addr %s264, 256
        %s266 = scalar_lea.vmem [#allocation5], %s265
        %p267 = pneg %p83
        %p268 = pneg %p80
        %s269 = smul.u32 32, %s29
        %p270 = scmp.lt.s32.totalorder %s269, 63
        %s271 = scalar_select %p270, %s269, 63
        %s272 = smul.addr %s271, 8
        %s273 = scalar_lea.vmem %s2, %s272
        %p274 = pneg %p109
        %p275 = pneg %p106
        %p276 = pneg %p130
        %p277 = pneg %p127
        %p278 = pneg %p156
        %p279 = pneg %p153
        %s280 = sand.u32 %s143, 1
        %s281 = scalar_lea.sflag [#allocation4], %s280
        %s282 = sand.u32 %s143, 1
        %s283 = smul.addr %s282, 8
        %s284 = scalar_lea.vmem [#allocation7], %s283
        %s285 = smul.u32 2, %s29
        %s286 = smul.u32 32, %s29
        %p287 = scmp.lt.s32.totalorder %s286, 63
        %s288 = scalar_select %p287, %s286, 63
        %s289 = smul.addr %s288, 8
        %s290 = scalar_lea.vmem %s2, %s289
        %s291 = smul.u32 32, %s29
        %p292 = scmp.eq.s32.totalorder %s29, 0
        // Predicated region
        $region45: #{feed_forward.1} parent=35 // pred_check
          %p293 = pneg %p292
        $region46: #{feed_forward.1} parent=35 // pred_check_branch
          %295 = sbr.rel (%p293) target = $region48
        $region47: #{feed_forward.1} parent=35 // pred_region
          %v296 = vld [vmem:[%s3] sm:$0x1]
          %v298 = vperm.slane %v296, 0
          %300 = vst [vmem:[%s284] sm:$0xff] %v298
        $region48: #{feed_forward.1} parent=35 // pred_fallthru
          _
        %v301 = vld [vmem:[%s239] sm:$0xff]
        %v302 = vld [vmem:[%s249] sm:$0xff]
        %v303 = vld [vmem:[%s249 + $0x10] sm:$0xff]
        %v304 = vld [vmem:[%s249 + $0x20] sm:$0xff]
        %v305 = vld [vmem:[%s249 + $0x30] sm:$0xff]
        %v306 = vld [vmem:[%s249 + $0x40] sm:$0xff]
        %v307 = vld [vmem:[%s249 + $0x50] sm:$0xff]
        %v308 = vld [vmem:[%s249 + $0x60] sm:$0xff]
        %v309 = vld [vmem:[%s249 + $0x70] sm:$0xff]
        %v310 = vld [vmem:[%s249 + $0x80] sm:$0xff]
        %v311 = vld [vmem:[%s249 + $0x90] sm:$0xff]
        %v312 = vld [vmem:[%s249 + $0xa0] sm:$0xff]
        %v313 = vld [vmem:[%s249 + $0xb0] sm:$0xff]
        %v314 = vld [vmem:[%s249 + $0xc0] sm:$0xff]
        %v315 = vld [vmem:[%s249 + $0xd0] sm:$0xff]
        %v316 = vld [vmem:[%s249 + $0xe0] sm:$0xff]
        %v317 = vld [vmem:[%s249 + $0xf0] sm:$0xff]
        %318 = vmatpush.msra.mxu0 %v317
        %319 = vmatpush.msra.mxu0 %v316
        %320 = vmatpush.msra.mxu0 %v315
        %321 = vmatpush.msra.mxu0 %v314
        %322 = vmatpush.msra.mxu0 %v313
        %323 = vmatpush.msra.mxu0 %v312
        %324 = vmatpush.msra.mxu0 %v311
        %325 = vmatpush.msra.mxu0 %v310
        %326 = vmatpush.msra.mxu0 %v309
        %327 = vmatpush.msra.mxu0 %v308
        %328 = vmatpush.msra.mxu0 %v307
        %329 = vmatpush.msra.mxu0 %v306
        %330 = vmatpush.msra.mxu0 %v305
        %331 = vmatpush.msra.mxu0 %v304
        %332 = vmatpush.msra.mxu0 %v303
        %333 = vmatpush.msra.mxu0 %v302
        %334 = vmatmul.f32.gmra.mxu0 %v301
        %v335 = vpop.f32.mrf.mxu0
        %v336 = vadd.f32 0.0, %v335
        %337 = vdwg.mxu0
        %v338 = vld [vmem:[%s284] sm:$0xff]
        %v339 = vld [vmem:[%s290] sm:$0xff]
        %v340 = vld [vmem:[%s290 + $0x8] sm:$0xff]
        %v341 = vld [vmem:[%s290 + $0x10] sm:$0xff]
        %v342 = vld [vmem:[%s290 + $0x18] sm:$0xff]
        %v343 = vld [vmem:[%s290 + $0x20] sm:$0xff]
        %v344 = vld [vmem:[%s290 + $0x28] sm:$0xff]
        %v345 = vld [vmem:[%s290 + $0x30] sm:$0xff]
        %v346 = vld [vmem:[%s290 + $0x38] sm:$0xff]
        %v347 = vld [vmem:[%s290 + $0x40] sm:$0xff]
        %v348 = vld [vmem:[%s290 + $0x48] sm:$0xff]
        %v349 = vld [vmem:[%s290 + $0x50] sm:$0xff]
        %v350 = vld [vmem:[%s290 + $0x58] sm:$0xff]
        %v351 = vld [vmem:[%s290 + $0x60] sm:$0xff]
        %v352 = vld [vmem:[%s290 + $0x68] sm:$0xff]
        %v353 = vld [vmem:[%s290 + $0x70] sm:$0xff]
        %v354 = vld [vmem:[%s290 + $0x78] sm:$0xff]
        %355 = vmatpush.msra.mxu0 %v354
        %356 = vmatpush.msra.mxu0 %v353
        %357 = vmatpush.msra.mxu0 %v352
        %358 = vmatpush.msra.mxu0 %v351
        %359 = vmatpush.msra.mxu0 %v350
        %360 = vmatpush.msra.mxu0 %v349
        %361 = vmatpush.msra.mxu0 %v348
        %362 = vmatpush.msra.mxu0 %v347
        %363 = vmatpush.msra.mxu0 %v346
        %364 = vmatpush.msra.mxu0 %v345
        %365 = vmatpush.msra.mxu0 %v344
        %366 = vmatpush.msra.mxu0 %v343
        %367 = vmatpush.msra.mxu0 %v342
        %368 = vmatpush.msra.mxu0 %v341
        %369 = vmatpush.msra.mxu0 %v340
        %370 = vmatpush.msra.mxu0 %v339
        %371 = vmatmul.f32.gmra.mxu0 %v336
        %v372 = vpop.f32.mrf.mxu0
        %v373 = vadd.f32 0.0, %v372
        %374 = vdwg.mxu0
        %v375 = vadd.f32 %v338, %v373
        %376 = vst [vmem:[%s284] sm:$0xff] %v375
        %v377 = vld [vmem:[%s249 + $0x8] sm:$0xff]
        %v378 = vld [vmem:[%s249 + $0x18] sm:$0xff]
        %v379 = vld [vmem:[%s249 + $0x28] sm:$0xff]
        %v380 = vld [vmem:[%s249 + $0x38] sm:$0xff]
        %v381 = vld [vmem:[%s249 + $0x48] sm:$0xff]
        %v382 = vld [vmem:[%s249 + $0x58] sm:$0xff]
        %v383 = vld [vmem:[%s249 + $0x68] sm:$0xff]
        %v384 = vld [vmem:[%s249 + $0x78] sm:$0xff]
        %v385 = vld [vmem:[%s249 + $0x88] sm:$0xff]
        %v386 = vld [vmem:[%s249 + $0x98] sm:$0xff]
        %v387 = vld [vmem:[%s249 + $0xa8] sm:$0xff]
        %v388 = vld [vmem:[%s249 + $0xb8] sm:$0xff]
        %v389 = vld [vmem:[%s249 + $0xc8] sm:$0xff]
        %v390 = vld [vmem:[%s249 + $0xd8] sm:$0xff]
        %v391 = vld [vmem:[%s249 + $0xe8] sm:$0xff]
        %v392 = vld [vmem:[%s249 + $0xf8] sm:$0xff]
        %393 = vmatpush.msra.mxu0 %v392
        %394 = vmatpush.msra.mxu0 %v391
        %395 = vmatpush.msra.mxu0 %v390
        %396 = vmatpush.msra.mxu0 %v389
        %397 = vmatpush.msra.mxu0 %v388
        %398 = vmatpush.msra.mxu0 %v387
        %399 = vmatpush.msra.mxu0 %v386
        %400 = vmatpush.msra.mxu0 %v385
        %401 = vmatpush.msra.mxu0 %v384
        %402 = vmatpush.msra.mxu0 %v383
        %403 = vmatpush.msra.mxu0 %v382
        %404 = vmatpush.msra.mxu0 %v381
        %405 = vmatpush.msra.mxu0 %v380
        %406 = vmatpush.msra.mxu0 %v379
        %407 = vmatpush.msra.mxu0 %v378
        %408 = vmatpush.msra.mxu0 %v377
        %409 = vmatmul.f32.gmra.mxu0 %v301
        %v410 = vpop.f32.mrf.mxu0
        %v411 = vadd.f32 0.0, %v410
        %412 = vdwg.mxu0
        %v413 = vld [vmem:[%s284] sm:$0xff]
        %v414 = vld [vmem:[%s290 + $0x80] sm:$0xff]
        %v415 = vld [vmem:[%s290 + $0x88] sm:$0xff]
        %v416 = vld [vmem:[%s290 + $0x90] sm:$0xff]
        %v417 = vld [vmem:[%s290 + $0x98] sm:$0xff]
        %v418 = vld [vmem:[%s290 + $0xa0] sm:$0xff]
        %v419 = vld [vmem:[%s290 + $0xa8] sm:$0xff]
        %v420 = vld [vmem:[%s290 + $0xb0] sm:$0xff]
        %v421 = vld [vmem:[%s290 + $0xb8] sm:$0xff]
        %v422 = vld [vmem:[%s290 + $0xc0] sm:$0xff]
        %v423 = vld [vmem:[%s290 + $0xc8] sm:$0xff]
        %v424 = vld [vmem:[%s290 + $0xd0] sm:$0xff]
        %v425 = vld [vmem:[%s290 + $0xd8] sm:$0xff]
        %v426 = vld [vmem:[%s290 + $0xe0] sm:$0xff]
        %v427 = vld [vmem:[%s290 + $0xe8] sm:$0xff]
        %v428 = vld [vmem:[%s290 + $0xf0] sm:$0xff]
        %v429 = vld [vmem:[%s290 + $0xf8] sm:$0xff]
        %430 = vmatpush.msra.mxu0 %v429
        %431 = vmatpush.msra.mxu0 %v428
        %432 = vmatpush.msra.mxu0 %v427
        %433 = vmatpush.msra.mxu0 %v426
        %434 = vmatpush.msra.mxu0 %v425
        %435 = vmatpush.msra.mxu0 %v424
        %436 = vmatpush.msra.mxu0 %v423
        %437 = vmatpush.msra.mxu0 %v422
        %438 = vmatpush.msra.mxu0 %v421
        %439 = vmatpush.msra.mxu0 %v420
        %440 = vmatpush.msra.mxu0 %v419
        %441 = vmatpush.msra.mxu0 %v418
        %442 = vmatpush.msra.mxu0 %v417
        %443 = vmatpush.msra.mxu0 %v416
        %444 = vmatpush.msra.mxu0 %v415
        %445 = vmatpush.msra.mxu0 %v414
        %446 = vmatmul.f32.gmra.mxu0 %v411
        %v447 = vpop.f32.mrf.mxu0
        %v448 = vadd.f32 0.0, %v447
        %449 = vdwg.mxu0
        %v450 = vadd.f32 %v413, %v448
        %451 = vst [vmem:[%s284] sm:$0xff] %v450
        %s452 = sand.u32 %s143, 1
        %s453 = scalar_lea.sflag [#allocation4], %s452
        %s454 = sand.u32 %s143, 1
        %s455 = smul.addr %s454, 8
        %s456 = scalar_lea.vmem [#allocation7], %s455
        // Predicated region
        $region49: #{feed_forward.1} parent=35 // pred_check
          %p457 = pneg %p153
        $region50: #{feed_forward.1} parent=35 // pred_check_branch
          %459 = sbr.rel (%p457) target = $region52
        $region51: #{feed_forward.1} parent=35 // pred_region
          %461 = vsyncadd %s453, 0
          %s462 = smul.addr %s28, 8
          %s463 = scalar_lea.hbm %s4, %s462
          %s465 = sshll.u32 %s456, 4
          %s466 = int_to_ptr.vmem [resolvable:$true] %s465
          %s467 = sshll.u32 %s463, 4
          %s468 = int_to_ptr.hbm [resolvable:$true] %s467
          %470 = dma.vmem_to_hbm [thread:$0]  %s466, 128, %s468, %s453
        $region52: #{feed_forward.1} parent=35 // pred_fallthru
          _
      $region36: #{feed_forward.1} parent=5 // pred_fallthru
        _
      %p471 = scmp.le.s32.totalorder 2, %s19
      // Predicated region
      $region53: #{feed_forward.1} parent=5 // pred_check
        %p472 = pneg %p471
      $region54: #{feed_forward.1} parent=5 // pred_check_branch
        %474 = sbr.rel (%p472) target = $region56
      $region55: #{feed_forward.1} parent=5 // pred_region
        %s475 = ssub.s32 %s19, 2
        // Predicated region
        $region57: #{feed_forward.1} parent=55 // pred_check
          %p476 = pneg %p159
        $region58: #{feed_forward.1} parent=55 // pred_check_branch
          %478 = sbr.rel (%p476) target = $region60
        $region59: #{feed_forward.1} parent=55 // pred_region
          %s479 = sand.u32 %s144, 1
          %s480 = scalar_lea.sflag [#allocation4], %s479
          %s481 = sand.u32 %s144, 1
          %s482 = smul.addr %s481, 8
          %s483 = scalar_lea.vmem [#allocation7], %s482
          %485 = dma.done %s480, 128
        $region60: #{feed_forward.1} parent=55 // pred_fallthru
          _
      $region56: #{feed_forward.1} parent=5 // pred_fallthru
        _
    $region6: #{feed_forward.1} parent=1 // loop_footer
      %s23 = sadd.s32 1, %s19
    $region7: #{feed_forward.1} parent=1 // loop_footer_branch
      %18 = sbr.rel target = $region3
    $region8: #{feed_forward.1} parent=1 // loop_exit
      _
    %486 = vsyncpa [#allocation3], 1
    %s487 = scalar_lea.sflag [#allocation3], 1
    %488 = vsyncpa %s487, 1
    %489 = vsyncpa [#allocation6], 1
    %s490 = scalar_lea.sflag [#allocation6], 1
    %491 = vsyncpa %s490, 1
    %492 = vsyncpa [#allocation4], 1
    %s493 = scalar_lea.sflag [#allocation4], 1
    %494 = vsyncpa %s493, 1

</llo_original>
